<compile_context>
chip_gen: v7x
topology: tpu7x:2x2x1
jax: 0.10.0
libtpu: 0.0.40
codegen_flags: <defaults>
</compile_context>

<pallas_src>
import functools

import jax
import jax.numpy as jnp
from jax.experimental import pallas as pl
from jax.experimental.pallas import tpu as pltpu


# --------------------------------------------------------------------------
# Kernel 1: L2 normalization (f32 math) -> bf16 embeddings + positive logits
# --------------------------------------------------------------------------
def _normalize_kernel(x0_ref, x1_ref, xn_ref, pos_ref, *, temperature):
    x0 = x0_ref[...].astype(jnp.float32)   # [bm, D]
    x1 = x1_ref[...].astype(jnp.float32)   # [bm, D]

    # F.normalize(x, dim=1): x / max(||x||_2, eps), eps = 1e-12 (torch default)
    n0 = jnp.sqrt(jnp.sum(x0 * x0, axis=1, keepdims=True))
    n1 = jnp.sqrt(jnp.sum(x1 * x1, axis=1, keepdims=True))
    x0n = x0 / jnp.maximum(n0, 1e-12)
    x1n = x1 / jnp.maximum(n1, 1e-12)

    # Stacked layout [2, bm, D]; reshaping (2, B, D) -> (2B, D) in the wrapper
    # is exactly the torch.cat((out0, out1), dim=0) order, with no VMEM concat.
    xn_ref[0, :, :] = x0n.astype(jnp.bfloat16)
    xn_ref[1, :, :] = x1n.astype(jnp.bfloat16)

    # Positive-pair logit in f32 (log-space positive term; no exp needed).
    pos_ref[...] = jnp.sum(x0n * x1n, axis=1, keepdims=True) * (1.0 / temperature)


# --------------------------------------------------------------------------
# Kernel 2: tiled exp-similarity row sums + per-row loss
# --------------------------------------------------------------------------
def _sim_loss_kernel(rows_ref, cols_ref, pos_ref, loss_ref, acc_ref, *, temperature):
    j = pl.program_id(1)
    inv_t = 1.0 / temperature

    @pl.when(j == 0)
    def _init():
        acc_ref[...] = jnp.zeros_like(acc_ref)

    # [tm, tn] logits on the MXU: contract the last dim of both bf16 operands
    # directly (no .T / XLU transpose), accumulate in f32.
    s = jax.lax.dot_general(
        rows_ref[...], cols_ref[...],
        dimension_numbers=(((1,), (1,)), ((), ())),
        preferred_element_type=jnp.float32,
    )
    # Stabilized: cosine similarity <= 1, so (s - 1)/T <= 0 and exp never
    # overflows, for any temperature.
    e = jnp.exp((s - 1.0) * inv_t)
    acc_ref[...] += jnp.sum(e, axis=1, keepdims=True)

    @pl.when(j == pl.num_programs(1) - 1)
    def _finalize():
        # Diagonal of out @ out.T is exactly 1 after L2 normalization, so its
        # stabilized contribution is exp(0) == 1 -> constant subtraction
        # instead of [2B,2B] iota/where masking.
        denom = acc_ref[...] - 1.0
        # -log(pos / denom) = log(denom) - pos_logit
        #                   = log(rowsum_scaled) + 1/T - pos_logit
        loss_ref[...] = jnp.log(denom) + inv_t - pos_ref[...]


# --------------------------------------------------------------------------
# Wrapper
# --------------------------------------------------------------------------
def _pick_tile(n, target, mult):
    """Largest divisor of n that is <= target and a multiple of `mult`;
    falls back to n (full dimension, always legal)."""
    t = (min(target, n) // mult) * mult
    while t >= mult:
        if n % t == 0:
            return t
        t -= mult
    return n


def nt_xent_loss(out0, out1, temperature: float = 0.5, *,
                 block_rows=None, block_cols=None, norm_block=None):
    eps = 1e-8
    if abs(temperature) < eps:
        raise ValueError("Illegal temperature: abs({}) < 1e-8".format(temperature))
    assert out0.shape == out1.shape and out0.ndim == 2
    B, D = out0.shape
    n = 2 * B
    temperature = float(temperature)

    # ---- Kernel 1: normalize + positive logits ----
    bm = norm_block or _pick_tile(B, 256, 16)
    assert B % bm == 0
    norm_fn = functools.partial(_normalize_kernel, temperature=temperature)
    xn, pos = pl.pallas_call(
        norm_fn,
        grid=(B // bm,),
        in_specs=[
            pl.BlockSpec((bm, D), lambda i: (i, 0)),
            pl.BlockSpec((bm, D), lambda i: (i, 0)),
        ],
        out_specs=[
            pl.BlockSpec((2, bm, D), lambda i: (0, i, 0)),
            pl.BlockSpec((bm, 1), lambda i: (i, 0)),
        ],
        out_shape=[
            jax.ShapeDtypeStruct((2, B, D), jnp.bfloat16),
            jax.ShapeDtypeStruct((B, 1), jnp.float32),
        ],
        compiler_params=pltpu.CompilerParams(dimension_semantics=("parallel",)),
    )(out0, out1)

    out_norm = xn.reshape(n, D)                  # == cat([x0n, x1n], 0), free reshape
    pos2 = jnp.concatenate([pos, pos], axis=0)   # [2B, 1] positive logits

    # ---- Kernel 2: tiled similarity row sums + per-row loss ----
    tm = block_rows or _pick_tile(n, 256, 16)
    tn = block_cols or _pick_tile(n, 512, 16)
    assert n % tm == 0 and n % tn == 0
    grid = (n // tm, n // tn)

    # VMEM budget: double-buffered bf16 row/col tiles + f32 [tm,tn] temporaries.
    est = 2 * (tm * D * 2) + 2 * (tn * D * 2) + 4 * (tm * tn * 4) + 8 * (tm * 4)
    vmem_limit = min(max(2 * est, 32 * 1024 * 1024), 64 * 1024 * 1024)

    sim_fn = functools.partial(_sim_loss_kernel, temperature=temperature)
    per_row_loss = pl.pallas_call(
        sim_fn,
        grid=grid,
        in_specs=[
            pl.BlockSpec((tm, D), lambda i, j: (i, 0)),   # row tile of out_norm
            pl.BlockSpec((tn, D), lambda i, j: (j, 0)),   # column tile of out_norm
            pl.BlockSpec((tm, 1), lambda i, j: (i, 0)),   # positive logits
        ],
        out_specs=pl.BlockSpec((tm, 1), lambda i, j: (i, 0)),
        out_shape=jax.ShapeDtypeStruct((n, 1), jnp.float32),
        scratch_shapes=[pltpu.VMEM((tm, 1), jnp.float32)],
        compiler_params=pltpu.CompilerParams(
            dimension_semantics=("parallel", "arbitrary"),
            vmem_limit_bytes=vmem_limit,
        ),
    )(out_norm, out_norm, pos2)

    # Tiny O(2B) reduction; kept in the wrapper so the "parallel" row axis
    # never races on a shared scalar.
    return jnp.mean(per_row_loss)


# --------------------------------------------------------------------------
# Pure-JAX reference mirroring the PyTorch forward
# --------------------------------------------------------------------------
def _nt_xent_ref(out0, out1, temperature=0.5):
    x0 = out0 / jnp.maximum(jnp.linalg.norm(out0, axis=1, keepdims=True), 1e-12)
    x1 = out1 / jnp.maximum(jnp.linalg.norm(out1, axis=1, keepdims=True), 1e-12)
    out = jnp.concatenate([x0, x1], axis=0)
    sim = jnp.exp(out @ out.T / temperature)
    m = sim.shape[0]
    sim = jnp.where(jnp.eye(m, dtype=bool), 0.0, sim)
    denom = sim.sum(axis=-1)
    pos = jnp.exp(jnp.sum(x0 * x1, axis=-1) / temperature)
    pos = jnp.concatenate([pos, pos], axis=0)
    return jnp.mean(-jnp.log(pos / denom))


if __name__ == "__main__":
    key = jax.random.PRNGKey(0)
    k0, k1, k2, k3 = jax.random.split(key, 4)

    # Small SimCLR projection-head outputs: batch=8, hidden=128.
    B, D = 8, 128
    out0 = jax.random.normal(k0, (B, D), dtype=jnp.float32)
    out1 = jax.random.normal(k1, (B, D), dtype=jnp.float32)
    loss = jax.block_until_ready(nt_xent_loss(out0, out1, temperature=0.5))
    ref = _nt_xent_ref(out0, out1, temperature=0.5)
    assert jnp.allclose(loss, ref, rtol=1e-2, atol=1e-2), (loss, ref)

    # Exercise the tiled grid path (multiple row / column tiles + grid on the
    # normalization kernel) at still-small shapes.
    B2, D2 = 32, 128
    a = jax.random.normal(k2, (B2, D2), dtype=jnp.float32)
    b = jax.random.normal(k3, (B2, D2), dtype=jnp.float32)
    loss2 = jax.block_until_ready(
        nt_xent_loss(a, b, temperature=0.5, block_rows=16, block_cols=32,
                     norm_block=16))
    ref2 = _nt_xent_ref(a, b, temperature=0.5)
    assert jnp.allclose(loss2, ref2, rtol=1e-2, atol=1e-2), (loss2, ref2)

    print("KERNEL_OK")
</pallas_src>

<mosaic_0001>
module attributes {stable_mosaic.version = 11 : i64} {
  func.func @_normalize_kernel(%arg0: i32, %arg1: memref<8x128xf32, #tpu.memory_space<vmem>>, %arg2: memref<8x128xf32, #tpu.memory_space<vmem>>, %arg3: memref<2x8x128xbf16, #tpu.memory_space<vmem>>, %arg4: memref<8x1xf32, #tpu.memory_space<vmem>>) attributes {dimension_semantics = [#tpu.dimension_semantics<parallel>], iteration_bounds = array<i64: 1>, scalar_prefetch = 0 : i64, scratch_operands = 0 : i64, tpu.core_type = #tpu.core_type<tc>, window_params = [{transform_indices = @transform_0, window_bounds = array<i64: 8, 128>}, {transform_indices = @transform_1, window_bounds = array<i64: 8, 128>}, {transform_indices = @transform_2, window_bounds = array<i64: 2, 8, 128>}, {transform_indices = @transform_3, window_bounds = array<i64: 8, 1>}]} {
    %c0 = arith.constant 0 : index
    %c0_0 = arith.constant 0 : index
    %0 = vector.load %arg1[%c0, %c0_0] : memref<8x128xf32, #tpu.memory_space<vmem>>, vector<8x128xf32>
    %c0_1 = arith.constant 0 : index
    %c0_2 = arith.constant 0 : index
    %1 = vector.load %arg2[%c0_1, %c0_2] : memref<8x128xf32, #tpu.memory_space<vmem>>, vector<8x128xf32>
    %2 = arith.mulf %0, %0 : vector<8x128xf32>
    %cst = arith.constant dense<0.000000e+00> : vector<8xf32>
    %3 = vector.multi_reduction <add>, %2, %cst [1] : vector<8x128xf32> to vector<8xf32>
    %4 = vector.shape_cast %3 : vector<8xf32> to vector<8x1xf32>
    %5 = math.sqrt %4 : vector<8x1xf32>
    %6 = arith.mulf %1, %1 : vector<8x128xf32>
    %cst_3 = arith.constant dense<0.000000e+00> : vector<8xf32>
    %7 = vector.multi_reduction <add>, %6, %cst_3 [1] : vector<8x128xf32> to vector<8xf32>
    %8 = vector.shape_cast %7 : vector<8xf32> to vector<8x1xf32>
    %9 = math.sqrt %8 : vector<8x1xf32>
    %cst_4 = arith.constant 9.99999996E-13 : f32
    %10 = vector.broadcast %cst_4 : f32 to vector<8x1xf32>
    %11 = arith.maximumf %5, %10 : vector<8x1xf32>
    %12 = vector.broadcast %11 : vector<8x1xf32> to vector<8x128xf32>
    %13 = arith.divf %0, %12 : vector<8x128xf32>
    %cst_5 = arith.constant 9.99999996E-13 : f32
    %14 = vector.broadcast %cst_5 : f32 to vector<8x1xf32>
    %15 = arith.maximumf %9, %14 : vector<8x1xf32>
    %16 = vector.broadcast %15 : vector<8x1xf32> to vector<8x128xf32>
    %17 = arith.divf %1, %16 : vector<8x128xf32>
    %18 = arith.truncf %13 : vector<8x128xf32> to vector<8x128xbf16>
    %c0_6 = arith.constant 0 : index
    %c0_7 = arith.constant 0 : index
    %c0_8 = arith.constant 0 : index
    %19 = vector.load %arg3[%c0_6, %c0_7, %c0_8] : memref<2x8x128xbf16, #tpu.memory_space<vmem>>, vector<1x8x128xbf16>
    %20 = vector.shape_cast %19 : vector<1x8x128xbf16> to vector<8x128xbf16>
    %21 = vector.shape_cast %18 : vector<8x128xbf16> to vector<1x8x128xbf16>
    tpu.vector_store %arg3[%c0_6, %c0_7, %c0_8], %21 {strides = array<i32>} : memref<2x8x128xbf16, #tpu.memory_space<vmem>>, vector<1x8x128xbf16>,
    %22 = arith.truncf %17 : vector<8x128xf32> to vector<8x128xbf16>
    %c1 = arith.constant 1 : index
    %c0_9 = arith.constant 0 : index
    %c0_10 = arith.constant 0 : index
    %23 = vector.load %arg3[%c1, %c0_9, %c0_10] : memref<2x8x128xbf16, #tpu.memory_space<vmem>>, vector<1x8x128xbf16>
    %24 = vector.shape_cast %23 : vector<1x8x128xbf16> to vector<8x128xbf16>
    %25 = vector.shape_cast %22 : vector<8x128xbf16> to vector<1x8x128xbf16>
    tpu.vector_store %arg3[%c1, %c0_9, %c0_10], %25 {strides = array<i32>} : memref<2x8x128xbf16, #tpu.memory_space<vmem>>, vector<1x8x128xbf16>,
    %26 = arith.mulf %13, %17 : vector<8x128xf32>
    %cst_11 = arith.constant dense<0.000000e+00> : vector<8xf32>
    %27 = vector.multi_reduction <add>, %26, %cst_11 [1] : vector<8x128xf32> to vector<8xf32>
    %28 = vector.shape_cast %27 : vector<8xf32> to vector<8x1xf32>
    %cst_12 = arith.constant 2.000000e+00 : f32
    %29 = vector.broadcast %cst_12 : f32 to vector<8x1xf32>
    %30 = arith.mulf %28, %29 : vector<8x1xf32>
    %c0_13 = arith.constant 0 : index
    %c0_14 = arith.constant 0 : index
    %31 = vector.load %arg4[%c0_13, %c0_14] : memref<8x1xf32, #tpu.memory_space<vmem>>, vector<8x1xf32>
    tpu.vector_store %arg4[%c0_13, %c0_14], %30 {strides = array<i32>} : memref<8x1xf32, #tpu.memory_space<vmem>>, vector<8x1xf32>,
    return
  }
  func.func @transform_0(%arg0: i32) -> (i32, i32) {
    %c0_i32 = arith.constant 0 : i32
    %c0_i32_0 = arith.constant 0 : i32
    return %arg0, %c0_i32 : i32, i32
  }
  func.func @transform_1(%arg0: i32) -> (i32, i32) {
    %c0_i32 = arith.constant 0 : i32
    %c0_i32_0 = arith.constant 0 : i32
    return %arg0, %c0_i32 : i32, i32
  }
  func.func @transform_2(%arg0: i32) -> (i32, i32, i32) {
    %c0_i32 = arith.constant 0 : i32
    %c0_i32_0 = arith.constant 0 : i32
    %c0_i32_1 = arith.constant 0 : i32
    return %c0_i32, %arg0, %c0_i32_0 : i32, i32, i32
  }
  func.func @transform_3(%arg0: i32) -> (i32, i32) {
    %c0_i32 = arith.constant 0 : i32
    %c0_i32_0 = arith.constant 0 : i32
    return %arg0, %c0_i32 : i32, i32
  }
}

</mosaic_0001>

<llo_original>
// kernel: tpu_custom_call.1
$region0: #{tpu_custom_call.1}
  #allocation0 [shape = 'u32[]', space=smem, size = 0x4, offset = 0x4, fixed_abs, tag = 'smem constant byte address 0x4 - core index']
  #allocation1 [shape = 'u32[144,128]{1,0:T(1,128)}', space=vmem, size = 0x12000, scoped, tag = 'internal scratch']
  %s0 = inlined_call_operand.hbm [shape: f32[8,128], index: 0, kind: input, shape index: {}]
  %s1 = inlined_call_operand.hbm [shape: f32[8,128], index: 1, kind: input, shape index: {}]
  %s2 = inlined_call_operand.hbm [shape: bf16[2,8,128], index: 2, kind: output, shape index: {0}]
  %s3 = inlined_call_operand.vmem [shape: f32[8,1], index: 3, kind: output, shape index: {1}]
  %4 = xla_tuple %s2, %s3
  %s5 = sld [smem:[#allocation0]]
  $region34: #{tpu_custom_call.1} parent=0
    _
  %s7 = ssub.s32 1, %s5
  %s8 = scalar_select 0, %s7, %s5
  $region1: #{tpu_custom_call.1} parent=0
    #allocation2 [shape = 'u8[4096]{0}', space=vmem, size = 0x1000, scoped, tag = 'input window, operand 0, single buffered']
    #allocation3 [shape = 's32[1]{0}', space=sflag, size = 0x4, scoped, tag = 'scoped memory for tpu_custom_call.1']
    #allocation4 [shape = 's32[1]{0}', space=sflag, size = 0x4, scoped, tag = 'scoped memory for tpu_custom_call.1']
    #allocation5 [shape = 'u8[4096]{0}', space=vmem, size = 0x1000, scoped, tag = 'input window, operand 1, single buffered']
    #allocation6 [shape = 's32[1]{0}', space=sflag, size = 0x4, scoped, tag = 'scoped memory for tpu_custom_call.1']
    #allocation7 [shape = 'u8[4096]{0}', space=vmem, size = 0x1000, scoped, tag = 'output window, operand 0, single buffered']
    %9 = vsyncpa [#allocation3], 0
    %10 = vsyncpa [#allocation6], 0
    %11 = vsyncpa [#allocation4], 0
    // Predicated region
    $region2: #{tpu_custom_call.1} parent=1 // pred_check
      _
    $region3: #{tpu_custom_call.1} parent=1 // pred_check_branch
      %13 = sbr.rel (0) target = $region5
    $region4: #{tpu_custom_call.1} parent=1 // pred_region
      %s15 = ssub.s32 128, 128
      %16 = vsyncadd [#allocation3], %s15
      %s18 = sshll.u32 [#allocation2], 4
      %s19 = int_to_ptr.vmem [resolvable:$true] %s18
      %21 = dma.hbm_to_vmem [thread:$0]  %s0, 128, %s19, [#allocation3]
    $region5: #{tpu_custom_call.1} parent=1 // pred_fallthru
      _
    // Predicated region
    $region6: #{tpu_custom_call.1} parent=1 // pred_check
      _
    $region7: #{tpu_custom_call.1} parent=1 // pred_check_branch
      %23 = sbr.rel (0) target = $region9
    $region8: #{tpu_custom_call.1} parent=1 // pred_region
      %s25 = ssub.s32 128, 128
      %26 = vsyncadd [#allocation6], %s25
      %s28 = sshll.u32 [#allocation5], 4
      %s29 = int_to_ptr.vmem [resolvable:$true] %s28
      %31 = dma.hbm_to_vmem [thread:$0]  %s1, 128, %s29, [#allocation6]
    $region9: #{tpu_custom_call.1} parent=1 // pred_fallthru
      _
    // Predicated region
    $region10: #{tpu_custom_call.1} parent=1 // pred_check
      _
    $region11: #{tpu_custom_call.1} parent=1 // pred_check_branch
      %33 = sbr.rel (0) target = $region13
    $region12: #{tpu_custom_call.1} parent=1 // pred_region
      %34 = dma.done [#allocation3], 128
    $region13: #{tpu_custom_call.1} parent=1 // pred_fallthru
      _
    // Predicated region
    $region14: #{tpu_custom_call.1} parent=1 // pred_check
      _
    $region15: #{tpu_custom_call.1} parent=1 // pred_check_branch
      %36 = sbr.rel (0) target = $region17
    $region16: #{tpu_custom_call.1} parent=1 // pred_region
      %37 = dma.done [#allocation6], 128
    $region17: #{tpu_custom_call.1} parent=1 // pred_fallthru
      _
    %v38 = vld [vmem:[#allocation2] sm:$0xff]
    %v39 = vld [vmem:[#allocation5] sm:$0xff]
    %v40 = vmul.f32 %v38, %v38
    %41 = vadd.xlane.f32.xlu0 %v40
    %v42 = vpop.xlane.xlu0 %41
    %v43 = vrsqrt.pop %v42
    %v44 = vmul.f32 %v42, %v43
    %vm45 = vcmp.eq.f32.partialorder %v42, inf
    %v46 = vsel %vm45, %v42, %v44
    %vm47 = vcmp.eq.f32.partialorder %v42, 0.0
    %v48 = vand.u32 %v42, 2147483648
    %v49 = vsel %vm47, %v48, %v46
    %v50 = vmul.f32 %v39, %v39
    %51 = vadd.xlane.f32.xlu0 %v50
    %v52 = vpop.xlane.xlu0 %51
    %v53 = vrsqrt.pop %v52
    %v54 = vmul.f32 %v52, %v53
    %vm55 = vcmp.eq.f32.partialorder %v52, inf
    %v56 = vsel %vm55, %v52, %v54
    %vm57 = vcmp.eq.f32.partialorder %v52, 0.0
    %v58 = vand.u32 %v52, 2147483648
    %v59 = vsel %vm57, %v58, %v56
    %v60 = vmax.f32 %v49, 1e-12
    %v61 = vrcp.pop %v60
    %v62 = vmul.f32 %v38, %v61
    %v63 = vmax.f32 %v59, 1e-12
    %v64 = vrcp.pop %v63
    %v65 = vmul.f32 %v39, %v64
    %v66 = vpack.c.bf16 %v62, %v62
    %67 = vst [vmem:[#allocation7] sm:$0xf] %v66
    %v68 = vpack.c.bf16 %v65, %v65
    %s69 = scalar_lea.vmem [#allocation7], 4
    %70 = vst [vmem:[%s69] sm:$0xf] %v68
    %v71 = vmul.f32 %v62, %v65
    %72 = vadd.xlane.f32.xlu0 %v71
    %v73 = vpop.xlane.xlu0 %72
    %v74 = vmul.f32 %v73, 2.0
    %vm75 = vcmask 7168
    %76 = vst.msk [vmem:[%s3] sm:$0xff] %vm75, %v74
    // Predicated region
    $region18: #{tpu_custom_call.1} parent=1 // pred_check
      _
    $region19: #{tpu_custom_call.1} parent=1 // pred_check_branch
      %78 = sbr.rel (0) target = $region21
    $region20: #{tpu_custom_call.1} parent=1 // pred_region
      %s80 = ssub.s32 128, 128
      %81 = vsyncadd [#allocation4], %s80
      %s82 = sshll.u32 [#allocation7], 4
      %s83 = int_to_ptr.vmem [resolvable:$true] %s82
      %88 = dma.vmem_to_hbm [thread:$0]  %s83, 128, %s2, [#allocation4], 64, 64, 4
    $region21: #{tpu_custom_call.1} parent=1 // pred_fallthru
      _
    // Predicated region
    $region22: #{tpu_custom_call.1} parent=1 // pred_check
      _
    $region23: #{tpu_custom_call.1} parent=1 // pred_check_branch
      %90 = sbr.rel (0) target = $region25
    $region24: #{tpu_custom_call.1} parent=1 // pred_region
      _
    $region25: #{tpu_custom_call.1} parent=1 // pred_fallthru
      _
    // Predicated region
    $region26: #{tpu_custom_call.1} parent=1 // pred_check
      _
    $region27: #{tpu_custom_call.1} parent=1 // pred_check_branch
      %92 = sbr.rel (0) target = $region29
    $region28: #{tpu_custom_call.1} parent=1 // pred_region
      %93 = dma.done [#allocation4], 128
    $region29: #{tpu_custom_call.1} parent=1 // pred_fallthru
      _
    // Predicated region
    $region30: #{tpu_custom_call.1} parent=1 // pred_check
      _
    $region31: #{tpu_custom_call.1} parent=1 // pred_check_branch
      %95 = sbr.rel (0) target = $region33
    $region32: #{tpu_custom_call.1} parent=1 // pred_region
      _
    $region33: #{tpu_custom_call.1} parent=1 // pred_fallthru
      _
    %96 = vsyncpa [#allocation3], 1
    %97 = vsyncpa [#allocation6], 1
    %98 = vsyncpa [#allocation4], 1

</llo_original>
